<compile_context>
chip_gen: v5e
topology: v5e:2x2
jax: 0.10.0
libtpu: 0.0.40
codegen_flags: <defaults>
</compile_context>

<pallas_src>
import numpy as np
import jax
import jax.numpy as jnp
from jax.experimental import pallas as pl
from jax.experimental.pallas import tpu as pltpu

VOCAB, EMBED, HIDDEN, OUT = 50, 32, 32, 8
B, T = 2, 8
H2 = 2 * HIDDEN
H3 = 3 * HIDDEN            # fused gate width [r | z | n] (torch.nn.GRU order)
BPAD = 8                   # pad batch rows to a full f32 sublane tile
VOCAB_PAD = 128            # pad vocab to a full lane tile for one-hot gather


def emotion_rnn_kernel(ids_ref,   # VMEM (T*BPAD, 1) int32, time-major
                       tbl_ref,   # VMEM (VOCAB_PAD, 3H) = emb@w_ih + b_ih + [b_hh_rz | 0]
                       whh_ref,   # VMEM (HIDDEN+1, 3H)  = [w_hh ; b_hh]
                       fc_ref,    # VMEM (HIDDEN+1, OUT) = [w_fc ; b_fc]
                       out_ref):  # VMEM (BPAD, OUT)
    # ---- embedding gather + input projection + biases as ONE MXU matmul ----
    ids = ids_ref[...]                                              # (T*BPAD, 1)
    iota = jax.lax.broadcasted_iota(jnp.int32, (T * BPAD, VOCAB_PAD), 1)
    onehot = (iota == ids).astype(jnp.float32)                      # (64, 128)
    gi_all = jnp.dot(onehot, tbl_ref[...],
                     preferred_element_type=jnp.float32)            # (T*BPAD, 3H)

    w_hh = whh_ref[0:HIDDEN, :]                                     # (H, 3H)
    # only the n-part of b_hh stays on the serial path (inside r*(...));
    # broadcast is hoisted out of the loop.
    b_hh_n = jnp.broadcast_to(whh_ref[HIDDEN:HIDDEN + 1, H2:],
                              (BPAD, HIDDEN))                       # (BPAD, H)

    # ---- unrolled GRU recurrence: one matmul + activations per step ----
    h = jnp.zeros((BPAD, HIDDEN), jnp.float32)
    for t in range(T):
        gi = gi_all[t * BPAD:(t + 1) * BPAD, :]                     # (8, 3H), tile aligned
        gh = jnp.dot(h, w_hh, preferred_element_type=jnp.float32)   # (8, 3H)
        rz = jax.nn.sigmoid(gi[:, :H2] + gh[:, :H2])                # fused r|z slab
        r = rz[:, :HIDDEN]
        z = rz[:, HIDDEN:]
        n = jnp.tanh(gi[:, H2:] + r * (gh[:, H2:] + b_hh_n))
        h = n + z * (h - n)                                         # 3-op update

    # ---- final linear on the last hidden state ----
    w_fc = fc_ref[0:HIDDEN, :]
    b_fc = fc_ref[HIDDEN:HIDDEN + 1, :]
    out_ref[...] = jnp.dot(h, w_fc, preferred_element_type=jnp.float32) + b_fc


def emotion_rnn_forward(x_ids, p):
    # ---- weight-only precompute (outside the kernel, ~19 KB total) ----
    # Fuse the input projection into the embedding table and hoist b_ih and
    # the r|z part of b_hh out of the recurrence.
    bias_rz = jnp.concatenate(
        [p["b_hh"][:, :H2], jnp.zeros((1, HIDDEN), jnp.float32)], axis=1)
    g_table = p["embedding"] @ p["w_ih"] + p["b_ih"] + bias_rz      # (VOCAB, 3H)
    tbl = jnp.zeros((VOCAB_PAD, H3), jnp.float32).at[:VOCAB].set(g_table)

    whh_pack = jnp.concatenate([p["w_hh"], p["b_hh"]], axis=0)      # (H+1, 3H)
    fc_pack = jnp.concatenate([p["w_fc"], p["b_fc"]], axis=0)       # (H+1, OUT)

    # ids: clamp (TPU VMEM has no bounds checks), pad batch rows to BPAD,
    # lay out time-major so step t reads an aligned 8-row slab.
    ids = jnp.clip(x_ids.astype(jnp.int32), 0, VOCAB - 1)
    ids = jnp.zeros((BPAD, T), jnp.int32).at[:B].set(ids)
    ids_tm = ids.T.reshape(T * BPAD, 1)                             # (T*BPAD, 1)

    out = pl.pallas_call(
        emotion_rnn_kernel,
        out_shape=jax.ShapeDtypeStruct((BPAD, OUT), jnp.float32),
        grid_spec=pltpu.PrefetchScalarGridSpec(
            num_scalar_prefetch=0,
            grid=(1,),                                   # single invocation
            in_specs=[
                pl.BlockSpec((T * BPAD, 1),     lambda i: (0, 0)),
                pl.BlockSpec((VOCAB_PAD, H3),   lambda i: (0, 0)),
                pl.BlockSpec((HIDDEN + 1, H3),  lambda i: (0, 0)),
                pl.BlockSpec((HIDDEN + 1, OUT), lambda i: (0, 0)),
            ],
            out_specs=pl.BlockSpec((BPAD, OUT), lambda i: (0, 0)),
        ),
        compiler_params=pltpu.CompilerParams(
            dimension_semantics=("arbitrary",)),         # recurrence is serial
    )(ids_tm, tbl, whh_pack, fc_pack)
    return out[:B]


def init_params(key):
    ks = jax.random.split(key, 7)
    s = 1.0 / np.sqrt(HIDDEN)
    emb = jax.random.normal(ks[0], (VOCAB, EMBED), jnp.float32) * 0.1
    emb = emb.at[0].set(0.0)  # padding_idx=0
    return dict(
        embedding=emb,
        # fused gate layout: columns are [r | z | n] (torch.nn.GRU order)
        w_ih=jax.random.uniform(ks[1], (EMBED, H3), jnp.float32, -s, s),
        w_hh=jax.random.uniform(ks[2], (HIDDEN, H3), jnp.float32, -s, s),
        b_ih=jax.random.uniform(ks[3], (1, H3), jnp.float32, -s, s),
        b_hh=jax.random.uniform(ks[4], (1, H3), jnp.float32, -s, s),
        w_fc=jax.random.uniform(ks[5], (HIDDEN, OUT), jnp.float32, -s, s),
        b_fc=jax.random.uniform(ks[6], (1, OUT), jnp.float32, -s, s),
    )


def reference_forward(x_ids, p):
    """Pure-JAX reference matching torch.nn.GRU semantics (h0 = 0)."""
    emb = p["embedding"][x_ids]                  # (B, T, E)
    xs = jnp.transpose(emb, (1, 0, 2))           # (T, B, E)

    def step(h, x_t):
        gi = x_t @ p["w_ih"] + p["b_ih"]
        gh = h @ p["w_hh"] + p["b_hh"]
        r = jax.nn.sigmoid(gi[:, :HIDDEN] + gh[:, :HIDDEN])
        z = jax.nn.sigmoid(gi[:, HIDDEN:H2] + gh[:, HIDDEN:H2])
        n = jnp.tanh(gi[:, H2:] + r * gh[:, H2:])
        h_new = (1.0 - z) * n + z * h
        return h_new, None

    h0 = jnp.zeros((B, HIDDEN), jnp.float32)
    h_final, _ = jax.lax.scan(step, h0, xs)
    return h_final @ p["w_fc"] + p["b_fc"]


if __name__ == "__main__":
    key = jax.random.PRNGKey(0)
    k_param, k_data = jax.random.split(key)
    params = init_params(k_param)
    x_ids = jax.random.randint(k_data, (B, T), 0, VOCAB, dtype=jnp.int32)

    out = emotion_rnn_forward(x_ids, params)
    out = jax.block_until_ready(out)

    ref = reference_forward(x_ids, params)
    np.testing.assert_allclose(np.asarray(out), np.asarray(ref),
                               rtol=1e-4, atol=1e-5)
    print("KERNEL_OK")
</pallas_src>

<mosaic_0001>
module attributes {stable_mosaic.version = 11 : i64} {
  func.func @emotion_rnn_kernel(%arg0: i32, %arg1: memref<64x1xi32, #tpu.memory_space<vmem>>, %arg2: memref<128x96xf32, #tpu.memory_space<vmem>>, %arg3: memref<33x96xf32, #tpu.memory_space<vmem>>, %arg4: memref<33x8xf32, #tpu.memory_space<vmem>>, %arg5: memref<8x8xf32, #tpu.memory_space<vmem>>) attributes {dimension_semantics = [#tpu.dimension_semantics<arbitrary>], iteration_bounds = array<i64: 1>, scalar_prefetch = 0 : i64, scratch_operands = 0 : i64, tpu.core_type = #tpu.core_type<tc>, window_params = [{pipeline_mode = #tpu.pipeline_mode<synchronous>, transform_indices = @transform_0, window_bounds = array<i64: 64, 1>}, {pipeline_mode = #tpu.pipeline_mode<synchronous>, transform_indices = @transform_1, window_bounds = array<i64: 128, 96>}, {pipeline_mode = #tpu.pipeline_mode<synchronous>, transform_indices = @transform_2, window_bounds = array<i64: 33, 96>}, {pipeline_mode = #tpu.pipeline_mode<synchronous>, transform_indices = @transform_3, window_bounds = array<i64: 33, 8>}, {pipeline_mode = #tpu.pipeline_mode<synchronous>, transform_indices = @transform_4, window_bounds = array<i64: 8, 8>}]} {
    %c0 = arith.constant 0 : index
    %c0_0 = arith.constant 0 : index
    %0 = vector.load %arg1[%c0, %c0_0] : memref<64x1xi32, #tpu.memory_space<vmem>>, vector<64x1xi32>
    %1 = tpu.iota {dimensions = array<i32: 1>} : vector<64x128xi32>
    %2 = vector.broadcast %0 : vector<64x1xi32> to vector<64x128xi32>
    %3 = arith.cmpi eq, %1, %2 : vector<64x128xi32>
    %4 = arith.extui %3 : vector<64x128xi1> to vector<64x128xi32>
    %5 = arith.sitofp %4 : vector<64x128xi32> to vector<64x128xf32>
    %c0_1 = arith.constant 0 : index
    %c0_2 = arith.constant 0 : index
    %6 = vector.load %arg2[%c0_1, %c0_2] : memref<128x96xf32, #tpu.memory_space<vmem>>, vector<128x96xf32>
    %cst = arith.constant dense<0.000000e+00> : vector<64x96xf32>
    %7 = tpu.matmul %5, %6, %cst {dimension_numbers = #tpu.dot_dimension_numbers<[1], [0], [0], [1], [0, 0, 1, 1], [], []>} : vector<64x128xf32>, vector<128x96xf32>, vector<64x96xf32> -> vector<64x96xf32>
    %c0_3 = arith.constant 0 : index
    %c0_4 = arith.constant 0 : index
    %8 = vector.load %arg3[%c0_3, %c0_4] : memref<33x96xf32, #tpu.memory_space<vmem>>, vector<32x96xf32>
    %c32 = arith.constant 32 : index
    %c64 = arith.constant 64 : index
    %9 = vector.load %arg3[%c32, %c64] : memref<33x96xf32, #tpu.memory_space<vmem>>, vector<1x32xf32>
    %10 = vector.shape_cast %9 : vector<1x32xf32> to vector<1x32xf32>
    %11 = vector.broadcast %10 : vector<1x32xf32> to vector<8x32xf32>
    %cst_5 = arith.constant 0.000000e+00 : f32
    %12 = vector.broadcast %cst_5 : f32 to vector<8x32xf32>
    %13 = vector.extract_strided_slice %7 {offsets = [0, 0], sizes = [8, 96], strides = [1, 1]} : vector<64x96xf32> to vector<8x96xf32>
    %cst_6 = arith.constant dense<0.000000e+00> : vector<8x96xf32>
    %14 = tpu.matmul %12, %8, %cst_6 {dimension_numbers = #tpu.dot_dimension_numbers<[1], [0], [0], [1], [0, 0, 1, 1], [], []>} : vector<8x32xf32>, vector<32x96xf32>, vector<8x96xf32> -> vector<8x96xf32>
    %15 = vector.extract_strided_slice %13 {offsets = [0, 0], sizes = [8, 64], strides = [1, 1]} : vector<8x96xf32> to vector<8x64xf32>
    %16 = vector.extract_strided_slice %14 {offsets = [0, 0], sizes = [8, 64], strides = [1, 1]} : vector<8x96xf32> to vector<8x64xf32>
    %17 = arith.addf %15, %16 : vector<8x64xf32>
    %18 = arith.negf %17 : vector<8x64xf32>
    %19 = math.exp %18 : vector<8x64xf32>
    %cst_7 = arith.constant 1.000000e+00 : f32
    %20 = vector.broadcast %cst_7 : f32 to vector<8x64xf32>
    %21 = arith.addf %20, %19 : vector<8x64xf32>
    %22 = arith.divf %20, %21 : vector<8x64xf32>
    %23 = vector.extract_strided_slice %22 {offsets = [0, 0], sizes = [8, 32], strides = [1, 1]} : vector<8x64xf32> to vector<8x32xf32>
    %24 = vector.extract_strided_slice %22 {offsets = [0, 32], sizes = [8, 32], strides = [1, 1]} : vector<8x64xf32> to vector<8x32xf32>
    %25 = vector.extract_strided_slice %13 {offsets = [0, 64], sizes = [8, 32], strides = [1, 1]} : vector<8x96xf32> to vector<8x32xf32>
    %26 = vector.extract_strided_slice %14 {offsets = [0, 64], sizes = [8, 32], strides = [1, 1]} : vector<8x96xf32> to vector<8x32xf32>
    %27 = arith.addf %26, %11 : vector<8x32xf32>
    %28 = arith.mulf %23, %27 : vector<8x32xf32>
    %29 = arith.addf %25, %28 : vector<8x32xf32>
    %30 = math.tanh %29 : vector<8x32xf32>
    %31 = arith.subf %12, %30 : vector<8x32xf32>
    %32 = arith.mulf %24, %31 : vector<8x32xf32>
    %33 = arith.addf %30, %32 : vector<8x32xf32>
    %34 = vector.extract_strided_slice %7 {offsets = [8, 0], sizes = [8, 96], strides = [1, 1]} : vector<64x96xf32> to vector<8x96xf32>
    %cst_8 = arith.constant dense<0.000000e+00> : vector<8x96xf32>
    %35 = tpu.matmul %33, %8, %cst_8 {dimension_numbers = #tpu.dot_dimension_numbers<[1], [0], [0], [1], [0, 0, 1, 1], [], []>} : vector<8x32xf32>, vector<32x96xf32>, vector<8x96xf32> -> vector<8x96xf32>
    %36 = vector.extract_strided_slice %34 {offsets = [0, 0], sizes = [8, 64], strides = [1, 1]} : vector<8x96xf32> to vector<8x64xf32>
    %37 = vector.extract_strided_slice %35 {offsets = [0, 0], sizes = [8, 64], strides = [1, 1]} : vector<8x96xf32> to vector<8x64xf32>
    %38 = arith.addf %36, %37 : vector<8x64xf32>
    %39 = arith.negf %38 : vector<8x64xf32>
    %40 = math.exp %39 : vector<8x64xf32>
    %cst_9 = arith.constant 1.000000e+00 : f32
    %41 = vector.broadcast %cst_9 : f32 to vector<8x64xf32>
    %42 = arith.addf %41, %40 : vector<8x64xf32>
    %43 = arith.divf %41, %42 : vector<8x64xf32>
    %44 = vector.extract_strided_slice %43 {offsets = [0, 0], sizes = [8, 32], strides = [1, 1]} : vector<8x64xf32> to vector<8x32xf32>
    %45 = vector.extract_strided_slice %43 {offsets = [0, 32], sizes = [8, 32], strides = [1, 1]} : vector<8x64xf32> to vector<8x32xf32>
    %46 = vector.extract_strided_slice %34 {offsets = [0, 64], sizes = [8, 32], strides = [1, 1]} : vector<8x96xf32> to vector<8x32xf32>
    %47 = vector.extract_strided_slice %35 {offsets = [0, 64], sizes = [8, 32], strides = [1, 1]} : vector<8x96xf32> to vector<8x32xf32>
    %48 = arith.addf %47, %11 : vector<8x32xf32>
    %49 = arith.mulf %44, %48 : vector<8x32xf32>
    %50 = arith.addf %46, %49 : vector<8x32xf32>
    %51 = math.tanh %50 : vector<8x32xf32>
    %52 = arith.subf %33, %51 : vector<8x32xf32>
    %53 = arith.mulf %45, %52 : vector<8x32xf32>
    %54 = arith.addf %51, %53 : vector<8x32xf32>
    %55 = vector.extract_strided_slice %7 {offsets = [16, 0], sizes = [8, 96], strides = [1, 1]} : vector<64x96xf32> to vector<8x96xf32>
    %cst_10 = arith.constant dense<0.000000e+00> : vector<8x96xf32>
    %56 = tpu.matmul %54, %8, %cst_10 {dimension_numbers = #tpu.dot_dimension_numbers<[1], [0], [0], [1], [0, 0, 1, 1], [], []>} : vector<8x32xf32>, vector<32x96xf32>, vector<8x96xf32> -> vector<8x96xf32>
    %57 = vector.extract_strided_slice %55 {offsets = [0, 0], sizes = [8, 64], strides = [1, 1]} : vector<8x96xf32> to vector<8x64xf32>
    %58 = vector.extract_strided_slice %56 {offsets = [0, 0], sizes = [8, 64], strides = [1, 1]} : vector<8x96xf32> to vector<8x64xf32>
    %59 = arith.addf %57, %58 : vector<8x64xf32>
    %60 = arith.negf %59 : vector<8x64xf32>
    %61 = math.exp %60 : vector<8x64xf32>
    %cst_11 = arith.constant 1.000000e+00 : f32
    %62 = vector.broadcast %cst_11 : f32 to vector<8x64xf32>
    %63 = arith.addf %62, %61 : vector<8x64xf32>
    %64 = arith.divf %62, %63 : vector<8x64xf32>
    %65 = vector.extract_strided_slice %64 {offsets = [0, 0], sizes = [8, 32], strides = [1, 1]} : vector<8x64xf32> to vector<8x32xf32>
    %66 = vector.extract_strided_slice %64 {offsets = [0, 32], sizes = [8, 32], strides = [1, 1]} : vector<8x64xf32> to vector<8x32xf32>
    %67 = vector.extract_strided_slice %55 {offsets = [0, 64], sizes = [8, 32], strides = [1, 1]} : vector<8x96xf32> to vector<8x32xf32>
    %68 = vector.extract_strided_slice %56 {offsets = [0, 64], sizes = [8, 32], strides = [1, 1]} : vector<8x96xf32> to vector<8x32xf32>
    %69 = arith.addf %68, %11 : vector<8x32xf32>
    %70 = arith.mulf %65, %69 : vector<8x32xf32>
    %71 = arith.addf %67, %70 : vector<8x32xf32>
    %72 = math.tanh %71 : vector<8x32xf32>
    %73 = arith.subf %54, %72 : vector<8x32xf32>
    %74 = arith.mulf %66, %73 : vector<8x32xf32>
    %75 = arith.addf %72, %74 : vector<8x32xf32>
    %76 = vector.extract_strided_slice %7 {offsets = [24, 0], sizes = [8, 96], strides = [1, 1]} : vector<64x96xf32> to vector<8x96xf32>
    %cst_12 = arith.constant dense<0.000000e+00> : vector<8x96xf32>
    %77 = tpu.matmul %75, %8, %cst_12 {dimension_numbers = #tpu.dot_dimension_numbers<[1], [0], [0], [1], [0, 0, 1, 1], [], []>} : vector<8x32xf32>, vector<32x96xf32>, vector<8x96xf32> -> vector<8x96xf32>
    %78 = vector.extract_strided_slice %76 {offsets = [0, 0], sizes = [8, 64], strides = [1, 1]} : vector<8x96xf32> to vector<8x64xf32>
    %79 = vector.extract_strided_slice %77 {offsets = [0, 0], sizes = [8, 64], strides = [1, 1]} : vector<8x96xf32> to vector<8x64xf32>
    %80 = arith.addf %78, %79 : vector<8x64xf32>
    %81 = arith.negf %80 : vector<8x64xf32>
    %82 = math.exp %81 : vector<8x64xf32>
    %cst_13 = arith.constant 1.000000e+00 : f32
    %83 = vector.broadcast %cst_13 : f32 to vector<8x64xf32>
    %84 = arith.addf %83, %82 : vector<8x64xf32>
    %85 = arith.divf %83, %84 : vector<8x64xf32>
    %86 = vector.extract_strided_slice %85 {offsets = [0, 0], sizes = [8, 32], strides = [1, 1]} : vector<8x64xf32> to vector<8x32xf32>
    %87 = vector.extract_strided_slice %85 {offsets = [0, 32], sizes = [8, 32], strides = [1, 1]} : vector<8x64xf32> to vector<8x32xf32>
    %88 = vector.extract_strided_slice %76 {offsets = [0, 64], sizes = [8, 32], strides = [1, 1]} : vector<8x96xf32> to vector<8x32xf32>
    %89 = vector.extract_strided_slice %77 {offsets = [0, 64], sizes = [8, 32], strides = [1, 1]} : vector<8x96xf32> to vector<8x32xf32>
    %90 = arith.addf %89, %11 : vector<8x32xf32>
    %91 = arith.mulf %86, %90 : vector<8x32xf32>
    %92 = arith.addf %88, %91 : vector<8x32xf32>
    %93 = math.tanh %92 : vector<8x32xf32>
    %94 = arith.subf %75, %93 : vector<8x32xf32>
    %95 = arith.mulf %87, %94 : vector<8x32xf32>
    %96 = arith.addf %93, %95 : vector<8x32xf32>
    %97 = vector.extract_strided_slice %7 {offsets = [32, 0], sizes = [8, 96], strides = [1, 1]} : vector<64x96xf32> to vector<8x96xf32>
    %cst_14 = arith.constant dense<0.000000e+00> : vector<8x96xf32>
    %98 = tpu.matmul %96, %8, %cst_14 {dimension_numbers = #tpu.dot_dimension_numbers<[1], [0], [0], [1], [0, 0, 1, 1], [], []>} : vector<8x32xf32>, vector<32x96xf32>, vector<8x96xf32> -> vector<8x96xf32>
    %99 = vector.extract_strided_slice %97 {offsets = [0, 0], sizes = [8, 64], strides = [1, 1]} : vector<8x96xf32> to vector<8x64xf32>
    %100 = vector.extract_strided_slice %98 {offsets = [0, 0], sizes = [8, 64], strides = [1, 1]} : vector<8x96xf32> to vector<8x64xf32>
    %101 = arith.addf %99, %100 : vector<8x64xf32>
    %102 = arith.negf %101 : vector<8x64xf32>
    %103 = math.exp %102 : vector<8x64xf32>
    %cst_15 = arith.constant 1.000000e+00 : f32
    %104 = vector.broadcast %cst_15 : f32 to vector<8x64xf32>
    %105 = arith.addf %104, %103 : vector<8x64xf32>
    %106 = arith.divf %104, %105 : vector<8x64xf32>
    %107 = vector.extract_strided_slice %106 {offsets = [0, 0], sizes = [8, 32], strides = [1, 1]} : vector<8x64xf32> to vector<8x32xf32>
    %108 = vector.extract_strided_slice %106 {offsets = [0, 32], sizes = [8, 32], strides = [1, 1]} : vector<8x64xf32> to vector<8x32xf32>
    %109 = vector.extract_strided_slice %97 {offsets = [0, 64], sizes = [8, 32], strides = [1, 1]} : vector<8x96xf32> to vector<8x32xf32>
    %110 = vector.extract_strided_slice %98 {offsets = [0, 64], sizes = [8, 32], strides = [1, 1]} : vector<8x96xf32> to vector<8x32xf32>
    %111 = arith.addf %110, %11 : vector<8x32xf32>
    %112 = arith.mulf %107, %111 : vector<8x32xf32>
    %113 = arith.addf %109, %112 : vector<8x32xf32>
    %114 = math.tanh %113 : vector<8x32xf32>
    %115 = arith.subf %96, %114 : vector<8x32xf32>
    %116 = arith.mulf %108, %115 : vector<8x32xf32>
    %117 = arith.addf %114, %116 : vector<8x32xf32>
    %118 = vector.extract_strided_slice %7 {offsets = [40, 0], sizes = [8, 96], strides = [1, 1]} : vector<64x96xf32> to vector<8x96xf32>
    %cst_16 = arith.constant dense<0.000000e+00> : vector<8x96xf32>
    %119 = tpu.matmul %117, %8, %cst_16 {dimension_numbers = #tpu.dot_dimension_numbers<[1], [0], [0], [1], [0, 0, 1, 1], [], []>} : vector<8x32xf32>, vector<32x96xf32>, vector<8x96xf32> -> vector<8x96xf32>
    %120 = vector.extract_strided_slice %118 {offsets = [0, 0], sizes = [8, 64], strides = [1, 1]} : vector<8x96xf32> to vector<8x64xf32>
    %121 = vector.extract_strided_slice %119 {offsets = [0, 0], sizes = [8, 64], strides = [1, 1]} : vector<8x96xf32> to vector<8x64xf32>
    %122 = arith.addf %120, %121 : vector<8x64xf32>
    %123 = arith.negf %122 : vector<8x64xf32>
    %124 = math.exp %123 : vector<8x64xf32>
    %cst_17 = arith.constant 1.000000e+00 : f32
    %125 = vector.broadcast %cst_17 : f32 to vector<8x64xf32>
    %126 = arith.addf %125, %124 : vector<8x64xf32>
    %127 = arith.divf %125, %126 : vector<8x64xf32>
    %128 = vector.extract_strided_slice %127 {offsets = [0, 0], sizes = [8, 32], strides = [1, 1]} : vector<8x64xf32> to vector<8x32xf32>
    %129 = vector.extract_strided_slice %127 {offsets = [0, 32], sizes = [8, 32], strides = [1, 1]} : vector<8x64xf32> to vector<8x32xf32>
    %130 = vector.extract_strided_slice %118 {offsets = [0, 64], sizes = [8, 32], strides = [1, 1]} : vector<8x96xf32> to vector<8x32xf32>
    %131 = vector.extract_strided_slice %119 {offsets = [0, 64], sizes = [8, 32], strides = [1, 1]} : vector<8x96xf32> to vector<8x32xf32>
    %132 = arith.addf %131, %11 : vector<8x32xf32>
    %133 = arith.mulf %128, %132 : vector<8x32xf32>
    %134 = arith.addf %130, %133 : vector<8x32xf32>
    %135 = math.tanh %134 : vector<8x32xf32>
    %136 = arith.subf %117, %135 : vector<8x32xf32>
    %137 = arith.mulf %129, %136 : vector<8x32xf32>
    %138 = arith.addf %135, %137 : vector<8x32xf32>
    %139 = vector.extract_strided_slice %7 {offsets = [48, 0], sizes = [8, 96], strides = [1, 1]} : vector<64x96xf32> to vector<8x96xf32>
    %cst_18 = arith.constant dense<0.000000e+00> : vector<8x96xf32>
    %140 = tpu.matmul %138, %8, %cst_18 {dimension_numbers = #tpu.dot_dimension_numbers<[1], [0], [0], [1], [0, 0, 1, 1], [], []>} : vector<8x32xf32>, vector<32x96xf32>, vector<8x96xf32> -> vector<8x96xf32>
    %141 = vector.extract_strided_slice %139 {offsets = [0, 0], sizes = [8, 64], strides = [1, 1]} : vector<8x96xf32> to vector<8x64xf32>
    %142 = vector.extract_strided_slice %140 {offsets = [0, 0], sizes = [8, 64], strides = [1, 1]} : vector<8x96xf32> to vector<8x64xf32>
    %143 = arith.addf %141, %142 : vector<8x64xf32>
    %144 = arith.negf %143 : vector<8x64xf32>
    %145 = math.exp %144 : vector<8x64xf32>
    %cst_19 = arith.constant 1.000000e+00 : f32
    %146 = vector.broadcast %cst_19 : f32 to vector<8x64xf32>
    %147 = arith.addf %146, %145 : vector<8x64xf32>
    %148 = arith.divf %146, %147 : vector<8x64xf32>
    %149 = vector.extract_strided_slice %148 {offsets = [0, 0], sizes = [8, 32], strides = [1, 1]} : vector<8x64xf32> to vector<8x32xf32>
    %150 = vector.extract_strided_slice %148 {offsets = [0, 32], sizes = [8, 32], strides = [1, 1]} : vector<8x64xf32> to vector<8x32xf32>
    %151 = vector.extract_strided_slice %139 {offsets = [0, 64], sizes = [8, 32], strides = [1, 1]} : vector<8x96xf32> to vector<8x32xf32>
    %152 = vector.extract_strided_slice %140 {offsets = [0, 64], sizes = [8, 32], strides = [1, 1]} : vector<8x96xf32> to vector<8x32xf32>
    %153 = arith.addf %152, %11 : vector<8x32xf32>
    %154 = arith.mulf %149, %153 : vector<8x32xf32>
    %155 = arith.addf %151, %154 : vector<8x32xf32>
    %156 = math.tanh %155 : vector<8x32xf32>
    %157 = arith.subf %138, %156 : vector<8x32xf32>
    %158 = arith.mulf %150, %157 : vector<8x32xf32>
    %159 = arith.addf %156, %158 : vector<8x32xf32>
    %160 = vector.extract_strided_slice %7 {offsets = [56, 0], sizes = [8, 96], strides = [1, 1]} : vector<64x96xf32> to vector<8x96xf32>
    %cst_20 = arith.constant dense<0.000000e+00> : vector<8x96xf32>
    %161 = tpu.matmul %159, %8, %cst_20 {dimension_numbers = #tpu.dot_dimension_numbers<[1], [0], [0], [1], [0, 0, 1, 1], [], []>} : vector<8x32xf32>, vector<32x96xf32>, vector<8x96xf32> -> vector<8x96xf32>
    %162 = vector.extract_strided_slice %160 {offsets = [0, 0], sizes = [8, 64], strides = [1, 1]} : vector<8x96xf32> to vector<8x64xf32>
    %163 = vector.extract_strided_slice %161 {offsets = [0, 0], sizes = [8, 64], strides = [1, 1]} : vector<8x96xf32> to vector<8x64xf32>
    %164 = arith.addf %162, %163 : vector<8x64xf32>
    %165 = arith.negf %164 : vector<8x64xf32>
    %166 = math.exp %165 : vector<8x64xf32>
    %cst_21 = arith.constant 1.000000e+00 : f32
    %167 = vector.broadcast %cst_21 : f32 to vector<8x64xf32>
    %168 = arith.addf %167, %166 : vector<8x64xf32>
    %169 = arith.divf %167, %168 : vector<8x64xf32>
    %170 = vector.extract_strided_slice %169 {offsets = [0, 0], sizes = [8, 32], strides = [1, 1]} : vector<8x64xf32> to vector<8x32xf32>
    %171 = vector.extract_strided_slice %169 {offsets = [0, 32], sizes = [8, 32], strides = [1, 1]} : vector<8x64xf32> to vector<8x32xf32>
    %172 = vector.extract_strided_slice %160 {offsets = [0, 64], sizes = [8, 32], strides = [1, 1]} : vector<8x96xf32> to vector<8x32xf32>
    %173 = vector.extract_strided_slice %161 {offsets = [0, 64], sizes = [8, 32], strides = [1, 1]} : vector<8x96xf32> to vector<8x32xf32>
    %174 = arith.addf %173, %11 : vector<8x32xf32>
    %175 = arith.mulf %170, %174 : vector<8x32xf32>
    %176 = arith.addf %172, %175 : vector<8x32xf32>
    %177 = math.tanh %176 : vector<8x32xf32>
    %178 = arith.subf %159, %177 : vector<8x32xf32>
    %179 = arith.mulf %171, %178 : vector<8x32xf32>
    %180 = arith.addf %177, %179 : vector<8x32xf32>
    %c0_22 = arith.constant 0 : index
    %c0_23 = arith.constant 0 : index
    %181 = vector.load %arg4[%c0_22, %c0_23] : memref<33x8xf32, #tpu.memory_space<vmem>>, vector<32x8xf32>
    %c32_24 = arith.constant 32 : index
    %c0_25 = arith.constant 0 : index
    %182 = vector.load %arg4[%c32_24, %c0_25] : memref<33x8xf32, #tpu.memory_space<vmem>>, vector<1x8xf32>
    %cst_26 = arith.constant dense<0.000000e+00> : vector<8x8xf32>
    %183 = tpu.matmul %180, %181, %cst_26 {dimension_numbers = #tpu.dot_dimension_numbers<[1], [0], [0], [1], [0, 0, 1, 1], [], []>} : vector<8x32xf32>, vector<32x8xf32>, vector<8x8xf32> -> vector<8x8xf32>
    %184 = vector.broadcast %182 : vector<1x8xf32> to vector<8x8xf32>
    %185 = arith.addf %183, %184 : vector<8x8xf32>
    %c0_27 = arith.constant 0 : index
    %c0_28 = arith.constant 0 : index
    %186 = vector.load %arg5[%c0_27, %c0_28] : memref<8x8xf32, #tpu.memory_space<vmem>>, vector<8x8xf32>
    tpu.vector_store %arg5[%c0_27, %c0_28], %185 {strides = array<i32>} : memref<8x8xf32, #tpu.memory_space<vmem>>, vector<8x8xf32>,
    return
  }
  func.func @transform_0(%arg0: i32) -> (i32, i32) {
    %c0_i32 = arith.constant 0 : i32
    %c0_i32_0 = arith.constant 0 : i32
    %c0_i32_1 = arith.constant 0 : i32
    return %c0_i32, %c0_i32_0 : i32, i32
  }
  func.func @transform_1(%arg0: i32) -> (i32, i32) {
    %c0_i32 = arith.constant 0 : i32
    %c0_i32_0 = arith.constant 0 : i32
    %c0_i32_1 = arith.constant 0 : i32
    return %c0_i32, %c0_i32_0 : i32, i32
  }
  func.func @transform_2(%arg0: i32) -> (i32, i32) {
    %c0_i32 = arith.constant 0 : i32
    %c0_i32_0 = arith.constant 0 : i32
    %c0_i32_1 = arith.constant 0 : i32
    return %c0_i32, %c0_i32_0 : i32, i32
  }
  func.func @transform_3(%arg0: i32) -> (i32, i32) {
    %c0_i32 = arith.constant 0 : i32
    %c0_i32_0 = arith.constant 0 : i32
    %c0_i32_1 = arith.constant 0 : i32
    return %c0_i32, %c0_i32_0 : i32, i32
  }
  func.func @transform_4(%arg0: i32) -> (i32, i32) {
    %c0_i32 = arith.constant 0 : i32
    %c0_i32_0 = arith.constant 0 : i32
    %c0_i32_1 = arith.constant 0 : i32
    return %c0_i32, %c0_i32_0 : i32, i32
  }
}

</mosaic_0001>

<llo_original>
// kernel: tpu_custom_call.1
$region0: #{tpu_custom_call.1}
  #allocation0 [shape = 'u32[]', space=smem, size = 0x4, offset = 0x4, fixed_abs, tag = 'smem constant byte address 0x4 - core index']
  #allocation1 [shape = 'u32[72,128]{1,0:T(1,128)}', space=vmem, size = 0x9000, scoped, tag = 'internal scratch']
  %s0 = inlined_call_operand.vmem [shape: s32[64,1], index: 0, kind: input, shape index: {}]
  %s1 = inlined_call_operand.vmem [shape: f32[128,96], index: 1, kind: input, shape index: {}]
  %s2 = inlined_call_operand.vmem [shape: f32[33,96], index: 2, kind: input, shape index: {}]
  %s3 = inlined_call_operand.vmem [shape: f32[33,8], index: 3, kind: input, shape index: {}]
  %s4 = inlined_call_operand.hbm [shape: f32[8,8], index: 4, kind: output, shape index: {}]
  %s5 = sld [smem:[#allocation0]]
  $region26: #{tpu_custom_call.1} parent=0
    _
  %s7 = ssub.s32 1, %s5
  %s8 = scalar_select 0, %s7, %s5
  $region1: #{tpu_custom_call.1} parent=0
    #allocation2 [shape = 'u8[4096]{0}', space=vmem, size = 0x1000, scoped, tag = 'output window, operand 0, single buffered']
    #allocation3 [shape = 's32[1]{0}', space=sflag, size = 0x4, scoped, tag = 'scoped memory for tpu_custom_call.1']
    %9 = vsyncpa [#allocation3], 0
    // Predicated region
    $region2: #{tpu_custom_call.1} parent=1 // pred_check
      _
    $region3: #{tpu_custom_call.1} parent=1 // pred_check_branch
      %11 = sbr.rel (0) target = $region5
    $region4: #{tpu_custom_call.1} parent=1 // pred_region
      _
    $region5: #{tpu_custom_call.1} parent=1 // pred_fallthru
      _
    // Predicated region
    $region6: #{tpu_custom_call.1} parent=1 // pred_check
      _
    $region7: #{tpu_custom_call.1} parent=1 // pred_check_branch
      %13 = sbr.rel (0) target = $region9
    $region8: #{tpu_custom_call.1} parent=1 // pred_region
      _
    $region9: #{tpu_custom_call.1} parent=1 // pred_fallthru
      _
    // Predicated region
    $region10: #{tpu_custom_call.1} parent=1 // pred_check
      _
    $region11: #{tpu_custom_call.1} parent=1 // pred_check_branch
      %15 = sbr.rel (0) target = $region13
    $region12: #{tpu_custom_call.1} parent=1 // pred_region
      _
    $region13: #{tpu_custom_call.1} parent=1 // pred_fallthru
      _
    // Predicated region
    $region14: #{tpu_custom_call.1} parent=1 // pred_check
      _
    $region15: #{tpu_custom_call.1} parent=1 // pred_check_branch
      %17 = sbr.rel (0) target = $region17
    $region16: #{tpu_custom_call.1} parent=1 // pred_region
      _
    $region17: #{tpu_custom_call.1} parent=1 // pred_fallthru
      _
    %v18 = vld [vmem:[%s0] sm:$0xff]
    %v19 = vld [vmem:[%s0 + $0x8] sm:$0xff]
    %v20 = vld [vmem:[%s0 + $0x10] sm:$0xff]
    %v21 = vld [vmem:[%s0 + $0x18] sm:$0xff]
    %v22 = vld [vmem:[%s0 + $0x20] sm:$0xff]
    %v23 = vld [vmem:[%s0 + $0x28] sm:$0xff]
    %v24 = vld [vmem:[%s0 + $0x30] sm:$0xff]
    %v25 = vld [vmem:[%s0 + $0x38] sm:$0xff]
    %v26 = vlaneseq
    %v27 = vand.u32 %v26, 127
    %28 = vset.pattern.permute.xlu0 0
    %29 = vperm.xlu0 %28, %v18
    %v30 = vpop.permute.xlu0 %29
    %31 = vset.pattern.permute.xlu0 0
    %32 = vperm.xlu0 %31, %v19
    %v33 = vpop.permute.xlu0 %32
    %34 = vset.pattern.permute.xlu0 0
    %35 = vperm.xlu0 %34, %v20
    %v36 = vpop.permute.xlu0 %35
    %37 = vset.pattern.permute.xlu0 0
    %38 = vperm.xlu0 %37, %v21
    %v39 = vpop.permute.xlu0 %38
    %40 = vset.pattern.permute.xlu0 0
    %41 = vperm.xlu0 %40, %v22
    %v42 = vpop.permute.xlu0 %41
    %43 = vset.pattern.permute.xlu0 0
    %44 = vperm.xlu0 %43, %v23
    %v45 = vpop.permute.xlu0 %44
    %46 = vset.pattern.permute.xlu0 0
    %47 = vperm.xlu0 %46, %v24
    %v48 = vpop.permute.xlu0 %47
    %49 = vset.pattern.permute.xlu0 0
    %50 = vperm.xlu0 %49, %v25
    %v51 = vpop.permute.xlu0 %50
    %vm52 = vcmp.eq.s32.totalorder %v27, %v30
    %vm53 = vcmp.eq.s32.totalorder %v27, %v33
    %vm54 = vcmp.eq.s32.totalorder %v27, %v36
    %vm55 = vcmp.eq.s32.totalorder %v27, %v39
    %vm56 = vcmp.eq.s32.totalorder %v27, %v42
    %vm57 = vcmp.eq.s32.totalorder %v27, %v45
    %vm58 = vcmp.eq.s32.totalorder %v27, %v48
    %vm59 = vcmp.eq.s32.totalorder %v27, %v51
    %v60 = vsel %vm52, 1, 0
    %v61 = vsel %vm53, 1, 0
    %v62 = vsel %vm54, 1, 0
    %v63 = vsel %vm55, 1, 0
    %v64 = vsel %vm56, 1, 0
    %v65 = vsel %vm57, 1, 0
    %v66 = vsel %vm58, 1, 0
    %v67 = vsel %vm59, 1, 0
    %v68 = vcvt.s32.f32 %v60
    %v69 = vcvt.s32.f32 %v61
    %v70 = vcvt.s32.f32 %v62
    %v71 = vcvt.s32.f32 %v63
    %v72 = vcvt.s32.f32 %v64
    %v73 = vcvt.s32.f32 %v65
    %v74 = vcvt.s32.f32 %v66
    %v75 = vcvt.s32.f32 %v67
    %v76 = vld [vmem:[%s1] sm:$0xff]
    %v77 = vld [vmem:[%s1 + $0x8] sm:$0xff]
    %v78 = vld [vmem:[%s1 + $0x10] sm:$0xff]
    %v79 = vld [vmem:[%s1 + $0x18] sm:$0xff]
    %v80 = vld [vmem:[%s1 + $0x20] sm:$0xff]
    %v81 = vld [vmem:[%s1 + $0x28] sm:$0xff]
    %v82 = vld [vmem:[%s1 + $0x30] sm:$0xff]
    %v83 = vld [vmem:[%s1 + $0x38] sm:$0xff]
    %v84 = vld [vmem:[%s1 + $0x40] sm:$0xff]
    %v85 = vld [vmem:[%s1 + $0x48] sm:$0xff]
    %v86 = vld [vmem:[%s1 + $0x50] sm:$0xff]
    %v87 = vld [vmem:[%s1 + $0x58] sm:$0xff]
    %v88 = vld [vmem:[%s1 + $0x60] sm:$0xff]
    %v89 = vld [vmem:[%s1 + $0x68] sm:$0xff]
    %v90 = vld [vmem:[%s1 + $0x70] sm:$0xff]
    %v91 = vld [vmem:[%s1 + $0x78] sm:$0xff]
    %92 = vmatpush.msra.mxu0 %v91
    %93 = vmatpush.msra.mxu0 %v90
    %94 = vmatpush.msra.mxu0 %v89
    %95 = vmatpush.msra.mxu0 %v88
    %96 = vmatpush.msra.mxu0 %v87
    %97 = vmatpush.msra.mxu0 %v86
    %98 = vmatpush.msra.mxu0 %v85
    %99 = vmatpush.msra.mxu0 %v84
    %100 = vmatpush.msra.mxu0 %v83
    %101 = vmatpush.msra.mxu0 %v82
    %102 = vmatpush.msra.mxu0 %v81
    %103 = vmatpush.msra.mxu0 %v80
    %104 = vmatpush.msra.mxu0 %v79
    %105 = vmatpush.msra.mxu0 %v78
    %106 = vmatpush.msra.mxu0 %v77
    %107 = vmatpush.msra.mxu0 %v76
    %108 = vmatmul.f32.gmra.mxu0 %v68
    %v109 = vpop.f32.mrf.mxu0
    %v110 = vadd.f32 0.0, %v109
    %111 = vmatmul.f32.gmra.mxu0 %v69
    %v112 = vpop.f32.mrf.mxu0
    %v113 = vadd.f32 0.0, %v112
    %114 = vmatmul.f32.gmra.mxu0 %v70
    %v115 = vpop.f32.mrf.mxu0
    %v116 = vadd.f32 0.0, %v115
    %117 = vmatmul.f32.gmra.mxu0 %v71
    %v118 = vpop.f32.mrf.mxu0
    %v119 = vadd.f32 0.0, %v118
    %120 = vmatmul.f32.gmra.mxu0 %v72
    %v121 = vpop.f32.mrf.mxu0
    %v122 = vadd.f32 0.0, %v121
    %123 = vmatmul.f32.gmra.mxu0 %v73
    %v124 = vpop.f32.mrf.mxu0
    %v125 = vadd.f32 0.0, %v124
    %126 = vmatmul.f32.gmra.mxu0 %v74
    %v127 = vpop.f32.mrf.mxu0
    %v128 = vadd.f32 0.0, %v127
    %129 = vmatmul.f32.gmra.mxu0 %v75
    %v130 = vpop.f32.mrf.mxu0
    %v131 = vadd.f32 0.0, %v130
    %132 = vdwg.mxu0
    %v133 = vld [vmem:[%s2] sm:$0xff]
    %v134 = vld [vmem:[%s2 + $0x8] sm:$0xff]
    %v135 = vld [vmem:[%s2 + $0x10] sm:$0xff]
    %v136 = vld [vmem:[%s2 + $0x18] sm:$0xff]
    %v137 = vld [vmem:[%s2 + $0x20] sm:$0x1]
    %v138 = vperm.slane %v137, 0
    %vm139 = vcmask 261120
    %v141 = vsel %vm139, 0.0, 0
    %143 = vmatpush.msra.mxu0 0.0
    %144 = vmatpush.msra.mxu0 0.0
    %145 = vmatpush.msra.mxu0 0.0
    %146 = vmatpush.msra.mxu0 0.0
    %147 = vmatpush.msra.mxu0 0.0
    %148 = vmatpush.msra.mxu0 0.0
    %149 = vmatpush.msra.mxu0 0.0
    %150 = vmatpush.msra.mxu0 0.0
    %151 = vmatpush.msra.mxu0 0.0
    %152 = vmatpush.msra.mxu0 0.0
    %153 = vmatpush.msra.mxu0 0.0
    %154 = vmatpush.msra.mxu0 0.0
    %155 = vmatpush.msra.mxu0 %v136
    %156 = vmatpush.msra.mxu0 %v135
    %157 = vmatpush.msra.mxu0 %v134
    %158 = vmatpush.msra.mxu0 %v133
    %159 = vmatmul.f32.gmra.mxu0 %v141
    %v160 = vpop.f32.mrf.mxu0
    %v161 = vadd.f32 0.0, %v160
    %162 = vdwg.mxu0
    %v163 = vadd.f32 %v110, %v161
    %v164 = vxor.u32 %v163, 2147483648
    %v165 = vmul.f32 %v164, 1.442695
    %v166 = vpow.pop %v165
    %v167 = vadd.f32 %v166, 1.0
    %v168 = vrcp.pop %v167
    %v169 = vmul.f32 %v167, %v168
    %v170 = vsub.f32 1.0, %v169
    %v171 = vmul.f32 %v168, %v170
    %v172 = vadd.f32 %v168, %v171
    %vm173 = vweird.f32 %v167
    %vm174 = vweird.f32 %v168
    %vm175 = vmor %vm173, %vm174
    %v176 = vsel %vm175, %v168, %v172
    %v177 = vand.u32 2147483647, %v167
    %vm178 = vcmp.eq.f32.partialorder %v177, 8.507059e+37
    %v179 = vand.u32 %v167, 2147483648
    %v180 = vor.u32 1.1754944e-38, %v179
    %v181 = vsel %vm178, %v180, %v176
    %v182 = vmul.f32 1.0, %v181
    %v183 = vadd.f32 %v161, %v138
    %185 = vrot.lane.b32.xlu0 %v183, 64
    %v186 = vpop.permute.xlu0 %185
    %v188 = vmul.f32 %v182, %v186
    %190 = vrot.lane.b32.xlu0 %v188, 64
    %v191 = vpop.permute.xlu0 %190
    %v193 = vadd.f32 %v110, %v191
    %v194 = vtanh.pop %v193
    %v195 = vsub.f32 0.0, %v194
    %197 = vrot.lane.b32.xlu0 %v195, 96
    %v198 = vpop.permute.xlu0 %197
    %v200 = vmul.f32 %v182, %v198
    %202 = vrot.lane.b32.xlu0 %v200, 32
    %v203 = vpop.permute.xlu0 %202
    %v205 = vadd.f32 %v194, %v203
    %207 = vrot.lane.b32.xlu0 %v205, 64
    %v208 = vpop.permute.xlu0 %207
    %v209 = vsel %vm139, %v208, 0
    %211 = vmatpush.msra.mxu0 0.0
    %212 = vmatpush.msra.mxu0 0.0
    %213 = vmatpush.msra.mxu0 0.0
    %214 = vmatpush.msra.mxu0 0.0
    %215 = vmatpush.msra.mxu0 0.0
    %216 = vmatpush.msra.mxu0 0.0
    %217 = vmatpush.msra.mxu0 0.0
    %218 = vmatpush.msra.mxu0 0.0
    %219 = vmatpush.msra.mxu0 0.0
    %220 = vmatpush.msra.mxu0 0.0
    %221 = vmatpush.msra.mxu0 0.0
    %222 = vmatpush.msra.mxu0 0.0
    %223 = vmatpush.msra.mxu0 %v136
    %224 = vmatpush.msra.mxu0 %v135
    %225 = vmatpush.msra.mxu0 %v134
    %226 = vmatpush.msra.mxu0 %v133
    %227 = vmatmul.f32.gmra.mxu0 %v209
    %v228 = vpop.f32.mrf.mxu0
    %v229 = vadd.f32 0.0, %v228
    %230 = vdwg.mxu0
    %v231 = vadd.f32 %v113, %v229
    %v232 = vxor.u32 %v231, 2147483648
    %v233 = vmul.f32 %v232, 1.442695
    %v234 = vpow.pop %v233
    %v235 = vadd.f32 %v234, 1.0
    %v236 = vrcp.pop %v235
    %v237 = vmul.f32 %v235, %v236
    %v238 = vsub.f32 1.0, %v237
    %v239 = vmul.f32 %v236, %v238
    %v240 = vadd.f32 %v236, %v239
    %vm241 = vweird.f32 %v235
    %vm242 = vweird.f32 %v236
    %vm243 = vmor %vm241, %vm242
    %v244 = vsel %vm243, %v236, %v240
    %v245 = vand.u32 2147483647, %v235
    %vm246 = vcmp.eq.f32.partialorder %v245, 8.507059e+37
    %v247 = vand.u32 %v235, 2147483648
    %v248 = vor.u32 1.1754944e-38, %v247
    %v249 = vsel %vm246, %v248, %v244
    %v250 = vmul.f32 1.0, %v249
    %v251 = vadd.f32 %v229, %v138
    %253 = vrot.lane.b32.xlu0 %v251, 64
    %v254 = vpop.permute.xlu0 %253
    %v256 = vmul.f32 %v250, %v254
    %258 = vrot.lane.b32.xlu0 %v256, 64
    %v259 = vpop.permute.xlu0 %258
    %v261 = vadd.f32 %v113, %v259
    %v262 = vtanh.pop %v261
    %v263 = vsub.f32 %v205, %v262
    %265 = vrot.lane.b32.xlu0 %v263, 96
    %v266 = vpop.permute.xlu0 %265
    %v268 = vmul.f32 %v250, %v266
    %270 = vrot.lane.b32.xlu0 %v268, 32
    %v271 = vpop.permute.xlu0 %270
    %v273 = vadd.f32 %v262, %v271
    %275 = vrot.lane.b32.xlu0 %v273, 64
    %v276 = vpop.permute.xlu0 %275
    %v277 = vsel %vm139, %v276, 0
    %279 = vmatpush.msra.mxu0 0.0
    %280 = vmatpush.msra.mxu0 0.0
    %281 = vmatpush.msra.mxu0 0.0
    %282 = vmatpush.msra.mxu0 0.0
    %283 = vmatpush.msra.mxu0 0.0
    %284 = vmatpush.msra.mxu0 0.0
    %285 = vmatpush.msra.mxu0 0.0
    %286 = vmatpush.msra.mxu0 0.0
    %287 = vmatpush.msra.mxu0 0.0
    %288 = vmatpush.msra.mxu0 0.0
    %289 = vmatpush.msra.mxu0 0.0
    %290 = vmatpush.msra.mxu0 0.0
    %291 = vmatpush.msra.mxu0 %v136
    %292 = vmatpush.msra.mxu0 %v135
    %293 = vmatpush.msra.mxu0 %v134
    %294 = vmatpush.msra.mxu0 %v133
    %295 = vmatmul.f32.gmra.mxu0 %v277
    %v296 = vpop.f32.mrf.mxu0
    %v297 = vadd.f32 0.0, %v296
    %298 = vdwg.mxu0
    %v299 = vadd.f32 %v116, %v297
    %v300 = vxor.u32 %v299, 2147483648
    %v301 = vmul.f32 %v300, 1.442695
    %v302 = vpow.pop %v301
    %v303 = vadd.f32 %v302, 1.0
    %v304 = vrcp.pop %v303
    %v305 = vmul.f32 %v303, %v304
    %v306 = vsub.f32 1.0, %v305
    %v307 = vmul.f32 %v304, %v306
    %v308 = vadd.f32 %v304, %v307
    %vm309 = vweird.f32 %v303
    %vm310 = vweird.f32 %v304
    %vm311 = vmor %vm309, %vm310
    %v312 = vsel %vm311, %v304, %v308
    %v313 = vand.u32 2147483647, %v303
    %vm314 = vcmp.eq.f32.partialorder %v313, 8.507059e+37
    %v315 = vand.u32 %v303, 2147483648
    %v316 = vor.u32 1.1754944e-38, %v315
    %v317 = vsel %vm314, %v316, %v312
    %v318 = vmul.f32 1.0, %v317
    %v319 = vadd.f32 %v297, %v138
    %321 = vrot.lane.b32.xlu0 %v319, 64
    %v322 = vpop.permute.xlu0 %321
    %v324 = vmul.f32 %v318, %v322
    %326 = vrot.lane.b32.xlu0 %v324, 64
    %v327 = vpop.permute.xlu0 %326
    %v329 = vadd.f32 %v116, %v327
    %v330 = vtanh.pop %v329
    %v331 = vsub.f32 %v273, %v330
    %333 = vrot.lane.b32.xlu0 %v331, 96
    %v334 = vpop.permute.xlu0 %333
    %v336 = vmul.f32 %v318, %v334
    %338 = vrot.lane.b32.xlu0 %v336, 32
    %v339 = vpop.permute.xlu0 %338
    %v341 = vadd.f32 %v330, %v339
    %343 = vrot.lane.b32.xlu0 %v341, 64
    %v344 = vpop.permute.xlu0 %343
    %v345 = vsel %vm139, %v344, 0
    %347 = vmatpush.msra.mxu0 0.0
    %348 = vmatpush.msra.mxu0 0.0
    %349 = vmatpush.msra.mxu0 0.0
    %350 = vmatpush.msra.mxu0 0.0
    %351 = vmatpush.msra.mxu0 0.0
    %352 = vmatpush.msra.mxu0 0.0
    %353 = vmatpush.msra.mxu0 0.0
    %354 = vmatpush.msra.mxu0 0.0
    %355 = vmatpush.msra.mxu0 0.0
    %356 = vmatpush.msra.mxu0 0.0
    %357 = vmatpush.msra.mxu0 0.0
    %358 = vmatpush.msra.mxu0 0.0
    %359 = vmatpush.msra.mxu0 %v136
    %360 = vmatpush.msra.mxu0 %v135
    %361 = vmatpush.msra.mxu0 %v134
    %362 = vmatpush.msra.mxu0 %v133
    %363 = vmatmul.f32.gmra.mxu0 %v345
    %v364 = vpop.f32.mrf.mxu0
    %v365 = vadd.f32 0.0, %v364
    %366 = vdwg.mxu0
    %v367 = vadd.f32 %v119, %v365
    %v368 = vxor.u32 %v367, 2147483648
    %v369 = vmul.f32 %v368, 1.442695
    %v370 = vpow.pop %v369
    %v371 = vadd.f32 %v370, 1.0
    %v372 = vrcp.pop %v371
    %v373 = vmul.f32 %v371, %v372
    %v374 = vsub.f32 1.0, %v373
    %v375 = vmul.f32 %v372, %v374
    %v376 = vadd.f32 %v372, %v375
    %vm377 = vweird.f32 %v371
    %vm378 = vweird.f32 %v372
    %vm379 = vmor %vm377, %vm378
    %v380 = vsel %vm379, %v372, %v376
    %v381 = vand.u32 2147483647, %v371
    %vm382 = vcmp.eq.f32.partialorder %v381, 8.507059e+37
    %v383 = vand.u32 %v371, 2147483648
    %v384 = vor.u32 1.1754944e-38, %v383
    %v385 = vsel %vm382, %v384, %v380
    %v386 = vmul.f32 1.0, %v385
    %v387 = vadd.f32 %v365, %v138
    %389 = vrot.lane.b32.xlu0 %v387, 64
    %v390 = vpop.permute.xlu0 %389
    %v392 = vmul.f32 %v386, %v390
    %394 = vrot.lane.b32.xlu0 %v392, 64
    %v395 = vpop.permute.xlu0 %394
    %v397 = vadd.f32 %v119, %v395
    %v398 = vtanh.pop %v397
    %v399 = vsub.f32 %v341, %v398
    %401 = vrot.lane.b32.xlu0 %v399, 96
    %v402 = vpop.permute.xlu0 %401
    %v404 = vmul.f32 %v386, %v402
    %406 = vrot.lane.b32.xlu0 %v404, 32
    %v407 = vpop.permute.xlu0 %406
    %v409 = vadd.f32 %v398, %v407
    %411 = vrot.lane.b32.xlu0 %v409, 64
    %v412 = vpop.permute.xlu0 %411
    %v413 = vsel %vm139, %v412, 0
    %415 = vmatpush.msra.mxu0 0.0
    %416 = vmatpush.msra.mxu0 0.0
    %417 = vmatpush.msra.mxu0 0.0
    %418 = vmatpush.msra.mxu0 0.0
    %419 = vmatpush.msra.mxu0 0.0
    %420 = vmatpush.msra.mxu0 0.0
    %421 = vmatpush.msra.mxu0 0.0
    %422 = vmatpush.msra.mxu0 0.0
    %423 = vmatpush.msra.mxu0 0.0
    %424 = vmatpush.msra.mxu0 0.0
    %425 = vmatpush.msra.mxu0 0.0
    %426 = vmatpush.msra.mxu0 0.0
    %427 = vmatpush.msra.mxu0 %v136
    %428 = vmatpush.msra.mxu0 %v135
    %429 = vmatpush.msra.mxu0 %v134
    %430 = vmatpush.msra.mxu0 %v133
    %431 = vmatmul.f32.gmra.mxu0 %v413
    %v432 = vpop.f32.mrf.mxu0
    %v433 = vadd.f32 0.0, %v432
    %434 = vdwg.mxu0
    %v435 = vadd.f32 %v122, %v433
    %v436 = vxor.u32 %v435, 2147483648
    %v437 = vmul.f32 %v436, 1.442695
    %v438 = vpow.pop %v437
    %v439 = vadd.f32 %v438, 1.0
    %v440 = vrcp.pop %v439
    %v441 = vmul.f32 %v439, %v440
    %v442 = vsub.f32 1.0, %v441
    %v443 = vmul.f32 %v440, %v442
    %v444 = vadd.f32 %v440, %v443
    %vm445 = vweird.f32 %v439
    %vm446 = vweird.f32 %v440
    %vm447 = vmor %vm445, %vm446
    %v448 = vsel %vm447, %v440, %v444
    %v449 = vand.u32 2147483647, %v439
    %vm450 = vcmp.eq.f32.partialorder %v449, 8.507059e+37
    %v451 = vand.u32 %v439, 2147483648
    %v452 = vor.u32 1.1754944e-38, %v451
    %v453 = vsel %vm450, %v452, %v448
    %v454 = vmul.f32 1.0, %v453
    %v455 = vadd.f32 %v433, %v138
    %457 = vrot.lane.b32.xlu0 %v455, 64
    %v458 = vpop.permute.xlu0 %457
    %v460 = vmul.f32 %v454, %v458
    %462 = vrot.lane.b32.xlu0 %v460, 64
    %v463 = vpop.permute.xlu0 %462
    %v465 = vadd.f32 %v122, %v463
    %v466 = vtanh.pop %v465
    %v467 = vsub.f32 %v409, %v466
    %469 = vrot.lane.b32.xlu0 %v467, 96
    %v470 = vpop.permute.xlu0 %469
    %v472 = vmul.f32 %v454, %v470
    %474 = vrot.lane.b32.xlu0 %v472, 32
    %v475 = vpop.permute.xlu0 %474
    %v477 = vadd.f32 %v466, %v475
    %479 = vrot.lane.b32.xlu0 %v477, 64
    %v480 = vpop.permute.xlu0 %479
    %v481 = vsel %vm139, %v480, 0
    %483 = vmatpush.msra.mxu0 0.0
    %484 = vmatpush.msra.mxu0 0.0
    %485 = vmatpush.msra.mxu0 0.0
    %486 = vmatpush.msra.mxu0 0.0
    %487 = vmatpush.msra.mxu0 0.0
    %488 = vmatpush.msra.mxu0 0.0
    %489 = vmatpush.msra.mxu0 0.0
    %490 = vmatpush.msra.mxu0 0.0
    %491 = vmatpush.msra.mxu0 0.0
    %492 = vmatpush.msra.mxu0 0.0
    %493 = vmatpush.msra.mxu0 0.0
    %494 = vmatpush.msra.mxu0 0.0
    %495 = vmatpush.msra.mxu0 %v136
    %496 = vmatpush.msra.mxu0 %v135
    %497 = vmatpush.msra.mxu0 %v134
    %498 = vmatpush.msra.mxu0 %v133
    %499 = vmatmul.f32.gmra.mxu0 %v481
    %v500 = vpop.f32.mrf.mxu0
    %v501 = vadd.f32 0.0, %v500
    %502 = vdwg.mxu0
    %v503 = vadd.f32 %v125, %v501
    %v504 = vxor.u32 %v503, 2147483648
    %v505 = vmul.f32 %v504, 1.442695
    %v506 = vpow.pop %v505
    %v507 = vadd.f32 %v506, 1.0
    %v508 = vrcp.pop %v507
    %v509 = vmul.f32 %v507, %v508
    %v510 = vsub.f32 1.0, %v509
    %v511 = vmul.f32 %v508, %v510
    %v512 = vadd.f32 %v508, %v511
    %vm513 = vweird.f32 %v507
    %vm514 = vweird.f32 %v508
    %vm515 = vmor %vm513, %vm514
    %v516 = vsel %vm515, %v508, %v512
    %v517 = vand.u32 2147483647, %v507
    %vm518 = vcmp.eq.f32.partialorder %v517, 8.507059e+37
    %v519 = vand.u32 %v507, 2147483648
    %v520 = vor.u32 1.1754944e-38, %v519
    %v521 = vsel %vm518, %v520, %v516
    %v522 = vmul.f32 1.0, %v521
    %v523 = vadd.f32 %v501, %v138
    %525 = vrot.lane.b32.xlu0 %v523, 64
    %v526 = vpop.permute.xlu0 %525
    %v528 = vmul.f32 %v522, %v526
    %530 = vrot.lane.b32.xlu0 %v528, 64
    %v531 = vpop.permute.xlu0 %530
    %v533 = vadd.f32 %v125, %v531
    %v534 = vtanh.pop %v533
    %v535 = vsub.f32 %v477, %v534
    %537 = vrot.lane.b32.xlu0 %v535, 96
    %v538 = vpop.permute.xlu0 %537
    %v540 = vmul.f32 %v522, %v538
    %542 = vrot.lane.b32.xlu0 %v540, 32
    %v543 = vpop.permute.xlu0 %542
    %v545 = vadd.f32 %v534, %v543
    %547 = vrot.lane.b32.xlu0 %v545, 64
    %v548 = vpop.permute.xlu0 %547
    %v549 = vsel %vm139, %v548, 0
    %551 = vmatpush.msra.mxu0 0.0
    %552 = vmatpush.msra.mxu0 0.0
    %553 = vmatpush.msra.mxu0 0.0
    %554 = vmatpush.msra.mxu0 0.0
    %555 = vmatpush.msra.mxu0 0.0
    %556 = vmatpush.msra.mxu0 0.0
    %557 = vmatpush.msra.mxu0 0.0
    %558 = vmatpush.msra.mxu0 0.0
    %559 = vmatpush.msra.mxu0 0.0
    %560 = vmatpush.msra.mxu0 0.0
    %561 = vmatpush.msra.mxu0 0.0
    %562 = vmatpush.msra.mxu0 0.0
    %563 = vmatpush.msra.mxu0 %v136
    %564 = vmatpush.msra.mxu0 %v135
    %565 = vmatpush.msra.mxu0 %v134
    %566 = vmatpush.msra.mxu0 %v133
    %567 = vmatmul.f32.gmra.mxu0 %v549
    %v568 = vpop.f32.mrf.mxu0
    %v569 = vadd.f32 0.0, %v568
    %570 = vdwg.mxu0
    %v571 = vadd.f32 %v128, %v569
    %v572 = vxor.u32 %v571, 2147483648
    %v573 = vmul.f32 %v572, 1.442695
    %v574 = vpow.pop %v573
    %v575 = vadd.f32 %v574, 1.0
    %v576 = vrcp.pop %v575
    %v577 = vmul.f32 %v575, %v576
    %v578 = vsub.f32 1.0, %v577
    %v579 = vmul.f32 %v576, %v578
    %v580 = vadd.f32 %v576, %v579
    %vm581 = vweird.f32 %v575
    %vm582 = vweird.f32 %v576
    %vm583 = vmor %vm581, %vm582
    %v584 = vsel %vm583, %v576, %v580
    %v585 = vand.u32 2147483647, %v575
    %vm586 = vcmp.eq.f32.partialorder %v585, 8.507059e+37
    %v587 = vand.u32 %v575, 2147483648
    %v588 = vor.u32 1.1754944e-38, %v587
    %v589 = vsel %vm586, %v588, %v584
    %v590 = vmul.f32 1.0, %v589
    %v591 = vadd.f32 %v569, %v138
    %593 = vrot.lane.b32.xlu0 %v591, 64
    %v594 = vpop.permute.xlu0 %593
    %v596 = vmul.f32 %v590, %v594
    %598 = vrot.lane.b32.xlu0 %v596, 64
    %v599 = vpop.permute.xlu0 %598
    %v601 = vadd.f32 %v128, %v599
    %v602 = vtanh.pop %v601
    %v603 = vsub.f32 %v545, %v602
    %605 = vrot.lane.b32.xlu0 %v603, 96
    %v606 = vpop.permute.xlu0 %605
    %v608 = vmul.f32 %v590, %v606
    %610 = vrot.lane.b32.xlu0 %v608, 32
    %v611 = vpop.permute.xlu0 %610
    %v613 = vadd.f32 %v602, %v611
    %615 = vrot.lane.b32.xlu0 %v613, 64
    %v616 = vpop.permute.xlu0 %615
    %v617 = vsel %vm139, %v616, 0
    %619 = vmatpush.msra.mxu0 0.0
    %620 = vmatpush.msra.mxu0 0.0
    %621 = vmatpush.msra.mxu0 0.0
    %622 = vmatpush.msra.mxu0 0.0
    %623 = vmatpush.msra.mxu0 0.0
    %624 = vmatpush.msra.mxu0 0.0
    %625 = vmatpush.msra.mxu0 0.0
    %626 = vmatpush.msra.mxu0 0.0
    %627 = vmatpush.msra.mxu0 0.0
    %628 = vmatpush.msra.mxu0 0.0
    %629 = vmatpush.msra.mxu0 0.0
    %630 = vmatpush.msra.mxu0 0.0
    %631 = vmatpush.msra.mxu0 %v136
    %632 = vmatpush.msra.mxu0 %v135
    %633 = vmatpush.msra.mxu0 %v134
    %634 = vmatpush.msra.mxu0 %v133
    %635 = vmatmul.f32.gmra.mxu0 %v617
    %v636 = vpop.f32.mrf.mxu0
    %v637 = vadd.f32 0.0, %v636
    %638 = vdwg.mxu0
    %v639 = vadd.f32 %v131, %v637
    %v640 = vxor.u32 %v639, 2147483648
    %v641 = vmul.f32 %v640, 1.442695
    %v642 = vpow.pop %v641
    %v643 = vadd.f32 %v642, 1.0
    %v644 = vrcp.pop %v643
    %v645 = vmul.f32 %v643, %v644
    %v646 = vsub.f32 1.0, %v645
    %v647 = vmul.f32 %v644, %v646
    %v648 = vadd.f32 %v644, %v647
    %vm649 = vweird.f32 %v643
    %vm650 = vweird.f32 %v644
    %vm651 = vmor %vm649, %vm650
    %v652 = vsel %vm651, %v644, %v648
    %v653 = vand.u32 2147483647, %v643
    %vm654 = vcmp.eq.f32.partialorder %v653, 8.507059e+37
    %v655 = vand.u32 %v643, 2147483648
    %v656 = vor.u32 1.1754944e-38, %v655
    %v657 = vsel %vm654, %v656, %v652
    %v658 = vmul.f32 1.0, %v657
    %v659 = vadd.f32 %v637, %v138
    %661 = vrot.lane.b32.xlu0 %v659, 64
    %v662 = vpop.permute.xlu0 %661
    %v664 = vmul.f32 %v658, %v662
    %666 = vrot.lane.b32.xlu0 %v664, 64
    %v667 = vpop.permute.xlu0 %666
    %v669 = vadd.f32 %v131, %v667
    %v670 = vtanh.pop %v669
    %v671 = vsub.f32 %v613, %v670
    %673 = vrot.lane.b32.xlu0 %v671, 96
    %v674 = vpop.permute.xlu0 %673
    %v676 = vmul.f32 %v658, %v674
    %678 = vrot.lane.b32.xlu0 %v676, 32
    %v679 = vpop.permute.xlu0 %678
    %v681 = vadd.f32 %v670, %v679
    %v682 = vld [vmem:[%s3] sm:$0xff]
    %v683 = vld [vmem:[%s3 + $0x8] sm:$0xff]
    %v684 = vld [vmem:[%s3 + $0x10] sm:$0xff]
    %v685 = vld [vmem:[%s3 + $0x18] sm:$0xff]
    %v686 = vld [vmem:[%s3 + $0x20] sm:$0x1]
    %v687 = vperm.slane %v686, 0
    %689 = vrot.lane.b32.xlu0 %v681, 64
    %v690 = vpop.permute.xlu0 %689
    %v691 = vsel %vm139, %v690, 0
    %693 = vmatpush.msra.mxu0 0.0
    %694 = vmatpush.msra.mxu0 0.0
    %695 = vmatpush.msra.mxu0 0.0
    %696 = vmatpush.msra.mxu0 0.0
    %697 = vmatpush.msra.mxu0 0.0
    %698 = vmatpush.msra.mxu0 0.0
    %699 = vmatpush.msra.mxu0 0.0
    %700 = vmatpush.msra.mxu0 0.0
    %701 = vmatpush.msra.mxu0 0.0
    %702 = vmatpush.msra.mxu0 0.0
    %703 = vmatpush.msra.mxu0 0.0
    %704 = vmatpush.msra.mxu0 0.0
    %705 = vmatpush.msra.mxu0 %v685
    %706 = vmatpush.msra.mxu0 %v684
    %707 = vmatpush.msra.mxu0 %v683
    %708 = vmatpush.msra.mxu0 %v682
    %709 = vmatmul.f32.gmra.mxu0 %v691
    %v710 = vpop.f32.mrf.mxu0
    %v711 = vadd.f32 %v687, %v710
    %712 = vdwg.mxu0
    %vm713 = vcmask 64512
    %714 = vst.msk [vmem:[#allocation2] sm:$0xff] %vm713, %v711
    // Predicated region
    $region18: #{tpu_custom_call.1} parent=1 // pred_check
      _
    $region19: #{tpu_custom_call.1} parent=1 // pred_check_branch
      %716 = sbr.rel (0) target = $region21
    $region20: #{tpu_custom_call.1} parent=1 // pred_region
      %718 = vsyncadd [#allocation3], 0
      %s720 = sshll.u32 [#allocation2], 4
      %s721 = int_to_ptr.vmem [resolvable:$true] %s720
      %s722 = sshll.u32 %s4, 4
      %s723 = int_to_ptr.hbm [resolvable:$true] %s722
      %725 = dma.vmem_to_hbm [thread:$0]  %s721, 128, %s723, [#allocation3]
    $region21: #{tpu_custom_call.1} parent=1 // pred_fallthru
      _
    // Predicated region
    $region22: #{tpu_custom_call.1} parent=1 // pred_check
      _
    $region23: #{tpu_custom_call.1} parent=1 // pred_check_branch
      %727 = sbr.rel (0) target = $region25
    $region24: #{tpu_custom_call.1} parent=1 // pred_region
      %729 = dma.done [#allocation3], 128
    $region25: #{tpu_custom_call.1} parent=1 // pred_fallthru
      _
    %730 = vsyncpa [#allocation3], 1

</llo_original>
